<compile_context>
chip_gen: v7x
topology: tpu7x:2x2x1
jax: 0.10.0
libtpu: 0.0.40
codegen_flags: <defaults>
</compile_context>

<pallas_src>
import functools

import jax
import jax.numpy as jnp
from jax.experimental import pallas as pl
from jax.experimental.pallas import tpu as pltpu

# CartPole-style dims (env.observation_space.shape[0] = 4, env.action_space.n = 2),
# hidden = 50 as in the PyTorch module.
N_STATES = 4
N_ACTIONS = 2
HIDDEN = 50

H_PAD = 128   # hidden lane padding (lane-dense activations / slabs)
A_PAD = 128   # output lane padding (lane-dense stores)


def _round_up(x, m):
    return ((x + m - 1) // m) * m


def dqn_mlp_kernel(x_ref, p1_ref, w2_ref, out_ref):
    # x_ref:  (TB, N_STATES)
    # p1_ref: (8, H_PAD)      rows: [W1^T (4) | b1 | b2 | zero | zero]
    # w2_ref: (H_PAD, A_PAD)  W2^T zero-padded
    # out_ref:(TB, A_PAD)     actions in lanes 0..N_ACTIONS-1
    x = x_ref[...]
    p1 = p1_ref[...]
    w1 = p1[:N_STATES, :]                     # (N_STATES, H_PAD)
    b1 = p1[N_STATES:N_STATES + 1, :]         # (1, H_PAD)
    b2 = p1[N_STATES + 1:N_STATES + 2, :]     # (1, A_PAD) -- padded lanes are zero

    h = jnp.dot(x, w1, preferred_element_type=jnp.float32) + b1
    h = jnp.maximum(h, 0.0)                   # ReLU
    y = jnp.dot(h, w2_ref[...], preferred_element_type=jnp.float32) + b2
    out_ref[...] = y.astype(out_ref.dtype)


def pack_params(w1, b1, w2, b2):
    """Pack PyTorch-layout params once into two kernel-ready, lane-dense slabs.

    w1: [HIDDEN, N_STATES], b1: [HIDDEN], w2: [N_ACTIONS, HIDDEN], b2: [N_ACTIONS]
    """
    slab1 = jnp.zeros((8, H_PAD), jnp.float32)
    slab1 = slab1.at[:N_STATES, :HIDDEN].set(jnp.asarray(w1, jnp.float32).T)
    slab1 = slab1.at[N_STATES, :HIDDEN].set(jnp.asarray(b1, jnp.float32))
    slab1 = slab1.at[N_STATES + 1, :N_ACTIONS].set(jnp.asarray(b2, jnp.float32))

    slab2 = jnp.zeros((H_PAD, A_PAD), jnp.float32)
    slab2 = slab2.at[:HIDDEN, :N_ACTIONS].set(jnp.asarray(w2, jnp.float32).T)
    return slab1, slab2


@functools.partial(jax.jit, static_argnames=("batch_tile",))
def dqn_forward(x, slab1, slab2, batch_tile=128):
    """Forward pass of Net using pre-packed params. Returns [B, N_ACTIONS] f32."""
    x = jnp.asarray(x, jnp.float32)
    B = x.shape[0]

    # Batch tile: multiple of 8 (f32 sublane), capped at 128; pad batch to a multiple.
    TB = min(batch_tile, _round_up(max(B, 1), 8))
    Bp = _round_up(B, TB)
    if Bp != B:
        x = jnp.pad(x, ((0, Bp - B), (0, 0)))

    grid = (Bp // TB,)
    cost = pl.CostEstimate(
        flops=2 * Bp * (N_STATES * HIDDEN + HIDDEN * N_ACTIONS),
        transcendentals=0,
        bytes_accessed=4 * (Bp * N_STATES + 8 * H_PAD + H_PAD * A_PAD + Bp * A_PAD),
    )

    out = pl.pallas_call(
        dqn_mlp_kernel,
        out_shape=jax.ShapeDtypeStruct((Bp, A_PAD), jnp.float32),
        grid=grid,
        in_specs=[
            pl.BlockSpec((TB, N_STATES), lambda i: (i, 0)),   # batch tile
            pl.BlockSpec((8, H_PAD), lambda i: (0, 0)),       # resident param slab 1
            pl.BlockSpec((H_PAD, A_PAD), lambda i: (0, 0)),   # resident param slab 2
        ],
        out_specs=pl.BlockSpec((TB, A_PAD), lambda i: (i, 0)),  # lane-dense output
        compiler_params=pltpu.CompilerParams(
            dimension_semantics=("parallel",)),                 # v7x dual-TC sharding
        cost_estimate=cost,
    )(x, slab1, slab2)

    return out[:B, :N_ACTIONS]


def init_params(key):
    """Mirror the PyTorch module: weights ~ N(0, 0.1), biases nn.Linear default
    U(-1/sqrt(fan_in), 1/sqrt(fan_in))."""
    k1, k2, k3, k4 = jax.random.split(key, 4)
    w1 = 0.1 * jax.random.normal(k1, (HIDDEN, N_STATES), jnp.float32)
    w2 = 0.1 * jax.random.normal(k2, (N_ACTIONS, HIDDEN), jnp.float32)
    bound1 = 1.0 / jnp.sqrt(jnp.float32(N_STATES))
    bound2 = 1.0 / jnp.sqrt(jnp.float32(HIDDEN))
    b1 = jax.random.uniform(k3, (HIDDEN,), jnp.float32, -bound1, bound1)
    b2 = jax.random.uniform(k4, (N_ACTIONS,), jnp.float32, -bound2, bound2)
    return w1, b1, w2, b2


if __name__ == "__main__":
    key = jax.random.PRNGKey(0)
    kx, kp = jax.random.split(key)

    batch = 2
    x = jax.random.normal(kx, (batch, N_STATES), jnp.float32)
    w1, b1, w2, b2 = init_params(kp)

    # Pack once (init-time), reuse for every forward call.
    slab1, slab2 = pack_params(w1, b1, w2, b2)

    actions_value = dqn_forward(x, slab1, slab2)
    jax.block_until_ready(actions_value)

    # Cross-check against plain-JAX reference of the same math.
    ref = jnp.maximum(x @ w1.T + b1, 0.0) @ w2.T + b2
    assert actions_value.shape == (batch, N_ACTIONS)
    assert jnp.allclose(actions_value, ref, atol=1e-5), "mismatch vs reference"

    # Also exercise a realistic replay-minibatch batch through the tiled grid path.
    xb = jax.random.normal(kx, (256, N_STATES), jnp.float32)
    out_b = dqn_forward(xb, slab1, slab2)
    jax.block_until_ready(out_b)
    ref_b = jnp.maximum(xb @ w1.T + b1, 0.0) @ w2.T + b2
    assert out_b.shape == (256, N_ACTIONS)
    assert jnp.allclose(out_b, ref_b, atol=1e-5), "mismatch vs reference (batched)"

    print("KERNEL_OK")
</pallas_src>

<mosaic_0001>
module attributes {stable_mosaic.version = 11 : i64} {
  func.func @dqn_mlp_kernel(%arg0: i32, %arg1: memref<8x4xf32, #tpu.memory_space<vmem>>, %arg2: memref<8x128xf32, #tpu.memory_space<vmem>>, %arg3: memref<128x128xf32, #tpu.memory_space<vmem>>, %arg4: memref<8x128xf32, #tpu.memory_space<vmem>>) attributes {dimension_semantics = [#tpu.dimension_semantics<parallel>], iteration_bounds = array<i64: 1>, scalar_prefetch = 0 : i64, scratch_operands = 0 : i64, tpu.core_type = #tpu.core_type<tc>, window_params = [{transform_indices = @transform_0, window_bounds = array<i64: 8, 4>}, {pipeline_mode = #tpu.pipeline_mode<synchronous>, transform_indices = @transform_1, window_bounds = array<i64: 8, 128>}, {pipeline_mode = #tpu.pipeline_mode<synchronous>, transform_indices = @transform_2, window_bounds = array<i64: 128, 128>}, {transform_indices = @transform_3, window_bounds = array<i64: 8, 128>}]} {
    %c0 = arith.constant 0 : index
    %c0_0 = arith.constant 0 : index
    %0 = vector.load %arg1[%c0, %c0_0] : memref<8x4xf32, #tpu.memory_space<vmem>>, vector<8x4xf32>
    %c0_1 = arith.constant 0 : index
    %c0_2 = arith.constant 0 : index
    %1 = vector.load %arg2[%c0_1, %c0_2] : memref<8x128xf32, #tpu.memory_space<vmem>>, vector<8x128xf32>
    %2 = vector.extract_strided_slice %1 {offsets = [0, 0], sizes = [4, 128], strides = [1, 1]} : vector<8x128xf32> to vector<4x128xf32>
    %3 = vector.extract_strided_slice %1 {offsets = [4, 0], sizes = [1, 128], strides = [1, 1]} : vector<8x128xf32> to vector<1x128xf32>
    %4 = vector.extract_strided_slice %1 {offsets = [5, 0], sizes = [1, 128], strides = [1, 1]} : vector<8x128xf32> to vector<1x128xf32>
    %cst = arith.constant dense<0.000000e+00> : vector<8x128xf32>
    %5 = tpu.matmul %0, %2, %cst {dimension_numbers = #tpu.dot_dimension_numbers<[1], [0], [0], [1], [0, 0, 1, 1], [], []>} : vector<8x4xf32>, vector<4x128xf32>, vector<8x128xf32> -> vector<8x128xf32>
    %6 = vector.broadcast %3 : vector<1x128xf32> to vector<8x128xf32>
    %7 = arith.addf %5, %6 : vector<8x128xf32>
    %cst_3 = arith.constant 0.000000e+00 : f32
    %8 = vector.broadcast %cst_3 : f32 to vector<8x128xf32>
    %9 = arith.maximumf %7, %8 : vector<8x128xf32>
    %c0_4 = arith.constant 0 : index
    %c0_5 = arith.constant 0 : index
    %10 = vector.load %arg3[%c0_4, %c0_5] : memref<128x128xf32, #tpu.memory_space<vmem>>, vector<128x128xf32>
    %cst_6 = arith.constant dense<0.000000e+00> : vector<8x128xf32>
    %11 = tpu.matmul %9, %10, %cst_6 {dimension_numbers = #tpu.dot_dimension_numbers<[1], [0], [0], [1], [0, 0, 1, 1], [], []>} : vector<8x128xf32>, vector<128x128xf32>, vector<8x128xf32> -> vector<8x128xf32>
    %12 = vector.broadcast %4 : vector<1x128xf32> to vector<8x128xf32>
    %13 = arith.addf %11, %12 : vector<8x128xf32>
    %c0_7 = arith.constant 0 : index
    %c0_8 = arith.constant 0 : index
    %14 = vector.load %arg4[%c0_7, %c0_8] : memref<8x128xf32, #tpu.memory_space<vmem>>, vector<8x128xf32>
    tpu.vector_store %arg4[%c0_7, %c0_8], %13 {strides = array<i32>} : memref<8x128xf32, #tpu.memory_space<vmem>>, vector<8x128xf32>,
    return
  }
  func.func @transform_0(%arg0: i32) -> (i32, i32) {
    %c0_i32 = arith.constant 0 : i32
    %c0_i32_0 = arith.constant 0 : i32
    return %arg0, %c0_i32 : i32, i32
  }
  func.func @transform_1(%arg0: i32) -> (i32, i32) {
    %c0_i32 = arith.constant 0 : i32
    %c0_i32_0 = arith.constant 0 : i32
    %c0_i32_1 = arith.constant 0 : i32
    return %c0_i32, %c0_i32_0 : i32, i32
  }
  func.func @transform_2(%arg0: i32) -> (i32, i32) {
    %c0_i32 = arith.constant 0 : i32
    %c0_i32_0 = arith.constant 0 : i32
    %c0_i32_1 = arith.constant 0 : i32
    return %c0_i32, %c0_i32_0 : i32, i32
  }
  func.func @transform_3(%arg0: i32) -> (i32, i32) {
    %c0_i32 = arith.constant 0 : i32
    %c0_i32_0 = arith.constant 0 : i32
    return %arg0, %c0_i32 : i32, i32
  }
}

</mosaic_0001>

<llo_original>
// kernel: dqn_forward.1
$region0: #{dqn_forward.1}
  #allocation0 [shape = 'u32[]', space=smem, size = 0x4, offset = 0x4, fixed_abs, tag = 'smem constant byte address 0x4 - core index']
  #allocation1 [shape = 'u32[144,128]{1,0:T(1,128)}', space=vmem, size = 0x12000, scoped, tag = 'internal scratch']
  %s0 = inlined_call_operand.vmem [shape: f32[8,4], index: 0, kind: input, shape index: {}]
  %s1 = inlined_call_operand.vmem [shape: f32[8,128], index: 1, kind: input, shape index: {}]
  %s2 = inlined_call_operand.hbm [shape: f32[128,128], index: 2, kind: input, shape index: {}]
  %s3 = inlined_call_operand.vmem [shape: f32[8,128], index: 3, kind: output, shape index: {}]
  %s4 = sld [smem:[#allocation0]]
  $region26: #{dqn_forward.1} parent=0
    _
  %s6 = ssub.s32 1, %s4
  %s7 = scalar_select 0, %s6, %s4
  $region1: #{dqn_forward.1} parent=0
    #allocation2 [shape = 'u8[65536]{0}', space=vmem, size = 0x10000, scoped, tag = 'input window, operand 2, single buffered']
    #allocation3 [shape = 's32[1]{0}', space=sflag, size = 0x4, scoped, tag = 'scoped memory for dqn_forward.1']
    %8 = vsyncpa [#allocation3], 0
    // Predicated region
    $region2: #{dqn_forward.1} parent=1 // pred_check
      _
    $region3: #{dqn_forward.1} parent=1 // pred_check_branch
      %10 = sbr.rel (0) target = $region5
    $region4: #{dqn_forward.1} parent=1 // pred_region
      _
    $region5: #{dqn_forward.1} parent=1 // pred_fallthru
      _
    // Predicated region
    $region6: #{dqn_forward.1} parent=1 // pred_check
      _
    $region7: #{dqn_forward.1} parent=1 // pred_check_branch
      %12 = sbr.rel (0) target = $region9
    $region8: #{dqn_forward.1} parent=1 // pred_region
      _
    $region9: #{dqn_forward.1} parent=1 // pred_fallthru
      _
    // Predicated region
    $region10: #{dqn_forward.1} parent=1 // pred_check
      _
    $region11: #{dqn_forward.1} parent=1 // pred_check_branch
      %14 = sbr.rel (0) target = $region13
    $region12: #{dqn_forward.1} parent=1 // pred_region
      %s16 = ssub.s32 2048, 2048
      %17 = vsyncadd [#allocation3], %s16
      %s18 = sshll.u32 [#allocation2], 4
      %s19 = int_to_ptr.vmem [resolvable:$true] %s18
      %24 = dma.hbm_to_vmem [thread:$0]  %s2, 2048, %s19, [#allocation3], 128, 128, 8
    $region13: #{dqn_forward.1} parent=1 // pred_fallthru
      _
    // Predicated region
    $region14: #{dqn_forward.1} parent=1 // pred_check
      _
    $region15: #{dqn_forward.1} parent=1 // pred_check_branch
      %26 = sbr.rel (0) target = $region17
    $region16: #{dqn_forward.1} parent=1 // pred_region
      %27 = dma.done [#allocation3], 2048
    $region17: #{dqn_forward.1} parent=1 // pred_fallthru
      _
    %v28 = vld [vmem:[%s0] sm:$0xff]
    %v29 = vld [vmem:[%s1] sm:$0xff]
    %v30 = vlaneseq
    %v31 = vshrl.u32 %v30, 7
    %v32 = vsub.s32 4, %v31
    %v33 = vrot.slane %v29, %v32
    %vm34 = vcmask 31744
    %v36 = vsel %vm34, %v28, 0
    %vm38 = vcmask 1043456
    %v40 = vsel %vm38, %v29, 0
    %42 = vmatprep.subr.mxu0 0.0
    %43 = vmatpush1.msra.mxu0 %v40
    %44 = vmatprep.subr.mxu0 0.0
    %45 = vmatpush1.msra.mxu0 0.0
    %46 = vmatprep.subr.mxu0 0.0
    %47 = vmatpush1.msra.mxu0 0.0
    %48 = vmatprep.subr.mxu0 0.0
    %49 = vmatpush1.msra.mxu0 0.0
    %50 = vmatprep.subr.mxu0 0.0
    %51 = vmatpush1.msra.mxu0 0.0
    %52 = vmatprep.subr.mxu0 0.0
    %53 = vmatpush1.msra.mxu0 0.0
    %54 = vmatprep.subr.mxu0 0.0
    %55 = vmatpush1.msra.mxu0 0.0
    %56 = vmatprep.subr.mxu0 0.0
    %57 = vmatpush1.msra.mxu0 0.0
    %58 = vmatprep.subr.mxu0 0.0
    %59 = vmatpush1.msra.mxu0 0.0
    %60 = vmatprep.subr.mxu0 0.0
    %61 = vmatpush1.msra.mxu0 0.0
    %62 = vmatprep.subr.mxu0 0.0
    %63 = vmatpush1.msra.mxu0 0.0
    %64 = vmatprep.subr.mxu0 0.0
    %65 = vmatpush1.msra.mxu0 0.0
    %66 = vmatprep.subr.mxu0 0.0
    %67 = vmatpush1.msra.mxu0 0.0
    %68 = vmatprep.subr.mxu0 0.0
    %69 = vmatpush1.msra.mxu0 0.0
    %70 = vmatprep.subr.mxu0 0.0
    %71 = vmatpush1.msra.mxu0 0.0
    %72 = vmatprep.subr.mxu0 0.0
    %73 = vmatpush1.msra.mxu0 0.0
    %74 = vmatprep.subr.mxu0 0.0
    %75 = vmatpush1.msra.mxu0 0.0
    %76 = vmatprep.subr.mxu0 0.0
    %77 = vmatpush1.msra.mxu0 0.0
    %78 = vmatprep.subr.mxu0 0.0
    %79 = vmatpush1.msra.mxu0 0.0
    %80 = vmatprep.subr.mxu0 0.0
    %81 = vmatpush1.msra.mxu0 0.0
    %82 = vmatprep.subr.mxu0 0.0
    %83 = vmatpush1.msra.mxu0 0.0
    %84 = vmatprep.subr.mxu0 0.0
    %85 = vmatpush1.msra.mxu0 0.0
    %86 = vmatprep.subr.mxu0 0.0
    %87 = vmatpush1.msra.mxu0 0.0
    %88 = vmatprep.subr.mxu0 0.0
    %89 = vmatpush1.msra.mxu0 0.0
    %90 = vmatprep.subr.mxu0 0.0
    %91 = vmatpush1.msra.mxu0 0.0
    %92 = vmatprep.subr.mxu0 0.0
    %93 = vmatpush1.msra.mxu0 0.0
    %94 = vmatprep.subr.mxu0 0.0
    %95 = vmatpush1.msra.mxu0 0.0
    %96 = vmatprep.subr.mxu0 0.0
    %97 = vmatpush1.msra.mxu0 0.0
    %98 = vmatprep.subr.mxu0 0.0
    %99 = vmatpush1.msra.mxu0 0.0
    %100 = vmatprep.subr.mxu0 0.0
    %101 = vmatpush1.msra.mxu0 0.0
    %102 = vmatprep.subr.mxu0 0.0
    %103 = vmatpush1.msra.mxu0 0.0
    %104 = vmatprep.subr.mxu0 0.0
    %105 = vmatpush1.msra.mxu0 0.0
    %106 = vmatprep.mubr.f32.mxu0 0.0
    %107 = vmatmul.mubr.f32.gmra.mrb[0].mxu0 %v36
    %v108 = vpop.f32.mrb[0].mxu0
    %v109 = vadd.f32 %v33, %v108
    %v110 = vpop.f32.mrb[0].mxu0
    %111 = vdwg.mxu0
    %v112 = vmax.f32 %v109, 0.0
    %v113 = vld [vmem:[#allocation2] sm:$0xff]
    %v114 = vld [vmem:[#allocation2 + $0x8] sm:$0xff]
    %v115 = vld [vmem:[#allocation2 + $0x10] sm:$0xff]
    %v116 = vld [vmem:[#allocation2 + $0x18] sm:$0xff]
    %v117 = vld [vmem:[#allocation2 + $0x20] sm:$0xff]
    %v118 = vld [vmem:[#allocation2 + $0x28] sm:$0xff]
    %v119 = vld [vmem:[#allocation2 + $0x30] sm:$0xff]
    %v120 = vld [vmem:[#allocation2 + $0x38] sm:$0xff]
    %v121 = vld [vmem:[#allocation2 + $0x40] sm:$0xff]
    %v122 = vld [vmem:[#allocation2 + $0x48] sm:$0xff]
    %v123 = vld [vmem:[#allocation2 + $0x50] sm:$0xff]
    %v124 = vld [vmem:[#allocation2 + $0x58] sm:$0xff]
    %v125 = vld [vmem:[#allocation2 + $0x60] sm:$0xff]
    %v126 = vld [vmem:[#allocation2 + $0x68] sm:$0xff]
    %v127 = vld [vmem:[#allocation2 + $0x70] sm:$0xff]
    %v128 = vld [vmem:[#allocation2 + $0x78] sm:$0xff]
    %v129 = vlaneseq
    %v130 = vshrl.u32 %v129, 7
    %v131 = vsub.s32 5, %v130
    %v132 = vrot.slane %v29, %v131
    %133 = vmatprep.subr.mxu0 0.0
    %134 = vmatpush1.msra.mxu0 %v113
    %135 = vmatprep.subr.mxu0 0.0
    %136 = vmatpush1.msra.mxu0 %v114
    %137 = vmatprep.subr.mxu0 0.0
    %138 = vmatpush1.msra.mxu0 %v115
    %139 = vmatprep.subr.mxu0 0.0
    %140 = vmatpush1.msra.mxu0 %v116
    %141 = vmatprep.subr.mxu0 0.0
    %142 = vmatpush1.msra.mxu0 %v117
    %143 = vmatprep.subr.mxu0 0.0
    %144 = vmatpush1.msra.mxu0 %v118
    %145 = vmatprep.subr.mxu0 0.0
    %146 = vmatpush1.msra.mxu0 %v119
    %147 = vmatprep.subr.mxu0 0.0
    %148 = vmatpush1.msra.mxu0 %v120
    %149 = vmatprep.subr.mxu0 0.0
    %150 = vmatpush1.msra.mxu0 %v121
    %151 = vmatprep.subr.mxu0 0.0
    %152 = vmatpush1.msra.mxu0 %v122
    %153 = vmatprep.subr.mxu0 0.0
    %154 = vmatpush1.msra.mxu0 %v123
    %155 = vmatprep.subr.mxu0 0.0
    %156 = vmatpush1.msra.mxu0 %v124
    %157 = vmatprep.subr.mxu0 0.0
    %158 = vmatpush1.msra.mxu0 %v125
    %159 = vmatprep.subr.mxu0 0.0
    %160 = vmatpush1.msra.mxu0 %v126
    %161 = vmatprep.subr.mxu0 0.0
    %162 = vmatpush1.msra.mxu0 %v127
    %163 = vmatprep.subr.mxu0 0.0
    %164 = vmatpush1.msra.mxu0 %v128
    %165 = vmatprep.subr.mxu0 0.0
    %166 = vmatpush1.msra.mxu0 0.0
    %167 = vmatprep.subr.mxu0 0.0
    %168 = vmatpush1.msra.mxu0 0.0
    %169 = vmatprep.subr.mxu0 0.0
    %170 = vmatpush1.msra.mxu0 0.0
    %171 = vmatprep.subr.mxu0 0.0
    %172 = vmatpush1.msra.mxu0 0.0
    %173 = vmatprep.subr.mxu0 0.0
    %174 = vmatpush1.msra.mxu0 0.0
    %175 = vmatprep.subr.mxu0 0.0
    %176 = vmatpush1.msra.mxu0 0.0
    %177 = vmatprep.subr.mxu0 0.0
    %178 = vmatpush1.msra.mxu0 0.0
    %179 = vmatprep.subr.mxu0 0.0
    %180 = vmatpush1.msra.mxu0 0.0
    %181 = vmatprep.subr.mxu0 0.0
    %182 = vmatpush1.msra.mxu0 0.0
    %183 = vmatprep.subr.mxu0 0.0
    %184 = vmatpush1.msra.mxu0 0.0
    %185 = vmatprep.subr.mxu0 0.0
    %186 = vmatpush1.msra.mxu0 0.0
    %187 = vmatprep.subr.mxu0 0.0
    %188 = vmatpush1.msra.mxu0 0.0
    %189 = vmatprep.subr.mxu0 0.0
    %190 = vmatpush1.msra.mxu0 0.0
    %191 = vmatprep.subr.mxu0 0.0
    %192 = vmatpush1.msra.mxu0 0.0
    %193 = vmatprep.subr.mxu0 0.0
    %194 = vmatpush1.msra.mxu0 0.0
    %195 = vmatprep.subr.mxu0 0.0
    %196 = vmatpush1.msra.mxu0 0.0
    %197 = vmatprep.mubr.f32.mxu0 0.0
    %198 = vmatmul.mubr.f32.gmra.mrb[0].mxu0 %v112
    %v199 = vpop.f32.mrb[0].mxu0
    %v200 = vadd.f32 %v132, %v199
    %v201 = vpop.f32.mrb[0].mxu0
    %202 = vdwg.mxu0
    %203 = vst [vmem:[%s3] sm:$0xff] %v200
    // Predicated region
    $region18: #{dqn_forward.1} parent=1 // pred_check
      _
    $region19: #{dqn_forward.1} parent=1 // pred_check_branch
      %205 = sbr.rel (0) target = $region21
    $region20: #{dqn_forward.1} parent=1 // pred_region
      _
    $region21: #{dqn_forward.1} parent=1 // pred_fallthru
      _
    // Predicated region
    $region22: #{dqn_forward.1} parent=1 // pred_check
      _
    $region23: #{dqn_forward.1} parent=1 // pred_check_branch
      %207 = sbr.rel (0) target = $region25
    $region24: #{dqn_forward.1} parent=1 // pred_region
      _
    $region25: #{dqn_forward.1} parent=1 // pred_fallthru
      _
    %208 = vsyncpa [#allocation3], 1

</llo_original>
